<compile_context>
chip_gen: v6e
topology: v6e:2x2x1
jax: 0.10.0
libtpu: 0.0.40
codegen_flags: <defaults>
</compile_context>

<pallas_src>
import functools

import jax
import jax.numpy as jnp
from jax.experimental import pallas as pl
from jax.experimental.pallas import tpu as pltpu


NEG_SLOPE = 0.01


def _leaky_relu(x):
    return jnp.where(x > 0, x, NEG_SLOPE * x)


def _round_up(n, m):
    return ((n + m - 1) // m) * m


# ----------------------------------------------------------------------------
# Fused kernel: CFE MLP + all per-source heads in one grid step per batch tile.
#   x_ref : (TB, 384)        bf16   (310 zero-padded to 384)
#   w1    : (384, 256)       bf16    b1: (1, 256)   f32
#   w2    : (256, 128)       bf16    b2: (1, 128)   f32
#   w3    : (128, 128)       bf16    b3: (1, 128)   f32  (64 out zero-padded)
#   wd    : (128, D2p)       bf16    bd: (1, D2p)   f32  (all DSFE heads packed)
#   wc    : (D2p, SCp)       bf16    bc: (1, SCp)   f32  (block-diag classifiers)
#   o_ref : (TB, SCp)        f32     (lane-dense, SCp multiple of 128)
# ----------------------------------------------------------------------------
def asjda_fused_kernel(x_ref, w1_ref, b1_ref, w2_ref, b2_ref, w3_ref, b3_ref,
                       wd_ref, bd_ref, wc_ref, bc_ref, o_ref):
    # shared CFE: 384 -> 256 -> 128 -> 128(=64 padded)
    h = jnp.dot(x_ref[...], w1_ref[...], preferred_element_type=jnp.float32)
    h = _leaky_relu(h + b1_ref[...])
    h = jnp.dot(h.astype(jnp.bfloat16), w2_ref[...],
                preferred_element_type=jnp.float32)
    h = _leaky_relu(h + b2_ref[...])
    h = jnp.dot(h.astype(jnp.bfloat16), w3_ref[...],
                preferred_element_type=jnp.float32)
    h = _leaky_relu(h + b3_ref[...])
    # all S DSFE heads at once: (TB, 128) @ (128, D2p)
    h = jnp.dot(h.astype(jnp.bfloat16), wd_ref[...],
                preferred_element_type=jnp.float32)
    h = _leaky_relu(h + bd_ref[...])
    # all S classifiers at once via block-diagonal weight: (TB,D2p)@(D2p,SCp)
    p = jnp.dot(h.astype(jnp.bfloat16), wc_ref[...],
                preferred_element_type=jnp.float32) + bc_ref[...]
    o_ref[...] = p.astype(o_ref.dtype)


def run_asjda_fused(xp, w1, b1, w2, b2, w3, b3, wd, bd, wc, bc, *, tb):
    B_pad, K_pad = xp.shape
    SCp = wc.shape[-1]
    nb = B_pad // tb

    def resident(a):
        nd = a.ndim
        return pl.BlockSpec(a.shape, lambda i, _nd=nd: (0,) * _nd)

    return pl.pallas_call(
        asjda_fused_kernel,
        out_shape=jax.ShapeDtypeStruct((B_pad, SCp), jnp.float32),
        grid=(nb,),
        in_specs=[
            pl.BlockSpec((tb, K_pad), lambda i: (i, 0)),   # batch-tiled input
            resident(w1), resident(b1),
            resident(w2), resident(b2),
            resident(w3), resident(b3),
            resident(wd), resident(bd),
            resident(wc), resident(bc),
        ],
        out_specs=pl.BlockSpec((tb, SCp), lambda i: (i, 0)),
        compiler_params=pltpu.CompilerParams(
            dimension_semantics=("parallel",)),   # batch tiles independent
    )(xp, w1, b1, w2, b2, w3, b3, wd, bd, wc, bc)


# ----------------------------------------------------------------------------
# Parameter init (canonical f32, PyTorch-like shapes) + kernel-ready packing.
# ----------------------------------------------------------------------------
def init_params(key, number_of_source=4, number_of_category=3):
    ks = jax.random.split(key, 8)
    scale = 0.1
    return {
        # CFE (stored (in, out) so kernels compute x @ W + b)
        "w1": scale * jax.random.normal(ks[0], (310, 256), jnp.float32),
        "b1": scale * jax.random.normal(ks[1], (1, 256), jnp.float32),
        "w2": scale * jax.random.normal(ks[2], (256, 128), jnp.float32),
        "b2": scale * jax.random.normal(ks[3], (1, 128), jnp.float32),
        "w3": scale * jax.random.normal(ks[4], (128, 64), jnp.float32),
        "b3": scale * jax.random.normal(ks[5], (1, 64), jnp.float32),
        # per-source heads, stacked along source axis
        "wd": scale * jax.random.normal(ks[6], (number_of_source, 64, 32),
                                        jnp.float32),
        "bd": jnp.zeros((number_of_source, 1, 32), jnp.float32),
        "wc": scale * jax.random.normal(ks[7],
                                        (number_of_source, 32,
                                         number_of_category), jnp.float32),
        "bc": jnp.zeros((number_of_source, 1, number_of_category),
                        jnp.float32),
    }


def pack_params(params, number_of_source):
    """One-time repack into the fused-kernel layout (bf16 weights, f32 bias).

    All lane (last) dims are zero-padded to multiples of 128 so every kernel
    matmul/store is lane-dense; zero weight rows/cols keep results exact.
    """
    S = number_of_source

    # --- CFE layer 1: pad K 310 -> 384 -------------------------------------
    w1 = params["w1"]                                   # (310, 256)
    k_in = w1.shape[0]
    k_pad = _round_up(k_in, 128)                        # 384
    w1p = jnp.pad(w1, ((0, k_pad - k_in), (0, 0)))

    # --- CFE layer 3: pad out 64 -> 128 -------------------------------------
    w3 = params["w3"]                                   # (128, 64)
    d1 = w3.shape[-1]                                   # 64
    d1p = _round_up(d1, 128)                            # 128
    w3p = jnp.pad(w3, ((0, 0), (0, d1p - d1)))
    b3p = jnp.pad(params["b3"], ((0, 0), (0, d1p - d1)))

    # --- DSFE heads packed: (d1p, S*32) padded to (d1p, D2p) -----------------
    wd = params["wd"][:S]                               # (S, 64, 32)
    d2 = S * wd.shape[-1]                               # S*32
    d2p = max(_round_up(d2, 128), 128)
    wd_flat = jnp.transpose(wd, (1, 0, 2)).reshape(d1, d2)
    wd_p = jnp.pad(wd_flat, ((0, d1p - d1), (0, d2p - d2)))
    bd_flat = jnp.transpose(params["bd"][:S], (1, 0, 2)).reshape(1, d2)
    bd_p = jnp.pad(bd_flat, ((0, 0), (0, d2p - d2)))

    # --- classifiers: block-diagonal (d2p, SCp) ------------------------------
    wc = params["wc"][:S]                               # (S, 32, C)
    C = wc.shape[-1]
    sc = S * C
    scp = max(_round_up(sc, 128), 128)
    wc_bd = jnp.zeros((d2p, scp), jnp.float32)
    for s in range(S):
        wc_bd = wc_bd.at[s * 32:(s + 1) * 32, s * C:(s + 1) * C].set(wc[s])
    bc_flat = params["bc"][:S].reshape(1, sc)
    bc_p = jnp.pad(bc_flat, ((0, 0), (0, scp - sc)))

    bf16 = lambda a: a.astype(jnp.bfloat16)
    return {
        "w1": bf16(w1p), "b1": params["b1"],
        "w2": bf16(params["w2"]), "b2": params["b2"],
        "w3": bf16(w3p), "b3": b3p,
        "wd": bf16(wd_p), "bd": bd_p,
        "wc": bf16(wc_bd), "bc": bc_p,
    }


@functools.partial(jax.jit,
                   static_argnames=("number_of_source", "number_of_category"))
def asjdanet_forward(packed, data_src, number_of_source, number_of_category):
    """Eval-mode forward: returns stacked predictions (S, B, num_category)."""
    S = number_of_source
    C = number_of_category
    B, k_in = data_src.shape
    k_pad = packed["w1"].shape[0]

    tb = 128 if B >= 128 else _round_up(B, 16)   # bf16 sublane-friendly tile
    B_pad = _round_up(B, tb)
    xp = jnp.pad(data_src.astype(jnp.bfloat16),
                 ((0, B_pad - B), (0, k_pad - k_in)))

    out_flat = run_asjda_fused(
        xp, packed["w1"], packed["b1"], packed["w2"], packed["b2"],
        packed["w3"], packed["b3"], packed["wd"], packed["bd"],
        packed["wc"], packed["bc"], tb=tb)               # (B_pad, SCp)

    out = out_flat[:B, :S * C].reshape(B, S, C)
    return jnp.transpose(out, (1, 0, 2))                 # (S, B, C)


def _reference(params, x, S):
    """Pure-JAX reference with the same bf16-operand / f32-accumulate matmuls."""
    bf = jnp.bfloat16

    def dot(a, b):
        return jnp.dot(a.astype(bf), b.astype(bf),
                       preferred_element_type=jnp.float32)

    h = _leaky_relu(dot(x, params["w1"]) + params["b1"])
    h = _leaky_relu(dot(h, params["w2"]) + params["b2"])
    h = _leaky_relu(dot(h, params["w3"]) + params["b3"])
    outs = []
    for i in range(S):
        f = _leaky_relu(dot(h, params["wd"][i]) + params["bd"][i])
        outs.append(dot(f, params["wc"][i]) + params["bc"][i])
    return jnp.stack(outs, axis=0)


if __name__ == "__main__":
    key = jax.random.PRNGKey(0)
    k_param, k_data = jax.random.split(key)

    number_of_source = 4
    number_of_category = 3
    batch = 8

    params = init_params(k_param, number_of_source, number_of_category)
    packed = pack_params(params, number_of_source)
    data_src = jax.random.normal(k_data, (batch, 310), jnp.float32)

    preds = asjdanet_forward(packed, data_src, number_of_source,
                             number_of_category)
    preds = jax.block_until_ready(preds)

    ref = _reference(params, data_src, number_of_source)
    assert preds.shape == (number_of_source, batch, number_of_category)
    assert jnp.allclose(preds, ref, atol=1e-2, rtol=1e-2)

    # The PyTorch eval forward returns a Python list of per-source predictions.
    pred_list = [preds[i] for i in range(number_of_source)]
    assert len(pred_list) == number_of_source

    print("KERNEL_OK")
</pallas_src>

<mosaic_0001>
module attributes {stable_mosaic.version = 11 : i64} {
  func.func @asjda_fused_kernel(%arg0: i32, %arg1: memref<16x384xbf16, #tpu.memory_space<vmem>>, %arg2: memref<384x256xbf16, #tpu.memory_space<vmem>>, %arg3: memref<1x256xf32, #tpu.memory_space<vmem>>, %arg4: memref<256x128xbf16, #tpu.memory_space<vmem>>, %arg5: memref<1x128xf32, #tpu.memory_space<vmem>>, %arg6: memref<128x128xbf16, #tpu.memory_space<vmem>>, %arg7: memref<1x128xf32, #tpu.memory_space<vmem>>, %arg8: memref<128x128xbf16, #tpu.memory_space<vmem>>, %arg9: memref<1x128xf32, #tpu.memory_space<vmem>>, %arg10: memref<128x128xbf16, #tpu.memory_space<vmem>>, %arg11: memref<1x128xf32, #tpu.memory_space<vmem>>, %arg12: memref<16x128xf32, #tpu.memory_space<vmem>>) attributes {dimension_semantics = [#tpu.dimension_semantics<parallel>], iteration_bounds = array<i64: 1>, scalar_prefetch = 0 : i64, scratch_operands = 0 : i64, tpu.core_type = #tpu.core_type<tc>, window_params = [{transform_indices = @transform_0, window_bounds = array<i64: 16, 384>}, {pipeline_mode = #tpu.pipeline_mode<synchronous>, transform_indices = @transform_1, window_bounds = array<i64: 384, 256>}, {pipeline_mode = #tpu.pipeline_mode<synchronous>, transform_indices = @transform_2, window_bounds = array<i64: 1, 256>}, {pipeline_mode = #tpu.pipeline_mode<synchronous>, transform_indices = @transform_3, window_bounds = array<i64: 256, 128>}, {pipeline_mode = #tpu.pipeline_mode<synchronous>, transform_indices = @transform_4, window_bounds = array<i64: 1, 128>}, {pipeline_mode = #tpu.pipeline_mode<synchronous>, transform_indices = @transform_5, window_bounds = array<i64: 128, 128>}, {pipeline_mode = #tpu.pipeline_mode<synchronous>, transform_indices = @transform_6, window_bounds = array<i64: 1, 128>}, {pipeline_mode = #tpu.pipeline_mode<synchronous>, transform_indices = @transform_7, window_bounds = array<i64: 128, 128>}, {pipeline_mode = #tpu.pipeline_mode<synchronous>, transform_indices = @transform_8, window_bounds = array<i64: 1, 128>}, {pipeline_mode = #tpu.pipeline_mode<synchronous>, transform_indices = @transform_9, window_bounds = array<i64: 128, 128>}, {pipeline_mode = #tpu.pipeline_mode<synchronous>, transform_indices = @transform_10, window_bounds = array<i64: 1, 128>}, {transform_indices = @transform_11, window_bounds = array<i64: 16, 128>}]} {
    %c0 = arith.constant 0 : index
    %c0_0 = arith.constant 0 : index
    %0 = vector.load %arg1[%c0, %c0_0] : memref<16x384xbf16, #tpu.memory_space<vmem>>, vector<16x384xbf16>
    %c0_1 = arith.constant 0 : index
    %c0_2 = arith.constant 0 : index
    %1 = vector.load %arg2[%c0_1, %c0_2] : memref<384x256xbf16, #tpu.memory_space<vmem>>, vector<384x256xbf16>
    %cst = arith.constant dense<0.000000e+00> : vector<16x256xf32>
    %2 = tpu.matmul %0, %1, %cst {dimension_numbers = #tpu.dot_dimension_numbers<[1], [0], [0], [1], [0, 0, 1, 1], [], []>} : vector<16x384xbf16>, vector<384x256xbf16>, vector<16x256xf32> -> vector<16x256xf32>
    %c0_3 = arith.constant 0 : index
    %c0_4 = arith.constant 0 : index
    %3 = vector.load %arg3[%c0_3, %c0_4] : memref<1x256xf32, #tpu.memory_space<vmem>>, vector<1x256xf32>
    %4 = vector.broadcast %3 : vector<1x256xf32> to vector<16x256xf32>
    %5 = arith.addf %2, %4 : vector<16x256xf32>
    %cst_5 = arith.constant 0.000000e+00 : f32
    %6 = vector.broadcast %cst_5 : f32 to vector<16x256xf32>
    %7 = arith.cmpf ogt, %5, %6 : vector<16x256xf32>
    %cst_6 = arith.constant 0.00999999977 : f32
    %8 = vector.broadcast %cst_6 : f32 to vector<16x256xf32>
    %9 = arith.mulf %8, %5 : vector<16x256xf32>
    %10 = arith.select %7, %5, %9 : vector<16x256xi1>, vector<16x256xf32>
    %11 = arith.truncf %10 : vector<16x256xf32> to vector<16x256xbf16>
    %c0_7 = arith.constant 0 : index
    %c0_8 = arith.constant 0 : index
    %12 = vector.load %arg4[%c0_7, %c0_8] : memref<256x128xbf16, #tpu.memory_space<vmem>>, vector<256x128xbf16>
    %cst_9 = arith.constant dense<0.000000e+00> : vector<16x128xf32>
    %13 = tpu.matmul %11, %12, %cst_9 {dimension_numbers = #tpu.dot_dimension_numbers<[1], [0], [0], [1], [0, 0, 1, 1], [], []>} : vector<16x256xbf16>, vector<256x128xbf16>, vector<16x128xf32> -> vector<16x128xf32>
    %c0_10 = arith.constant 0 : index
    %c0_11 = arith.constant 0 : index
    %14 = vector.load %arg5[%c0_10, %c0_11] : memref<1x128xf32, #tpu.memory_space<vmem>>, vector<1x128xf32>
    %15 = vector.broadcast %14 : vector<1x128xf32> to vector<16x128xf32>
    %16 = arith.addf %13, %15 : vector<16x128xf32>
    %cst_12 = arith.constant 0.000000e+00 : f32
    %17 = vector.broadcast %cst_12 : f32 to vector<16x128xf32>
    %18 = arith.cmpf ogt, %16, %17 : vector<16x128xf32>
    %cst_13 = arith.constant 0.00999999977 : f32
    %19 = vector.broadcast %cst_13 : f32 to vector<16x128xf32>
    %20 = arith.mulf %19, %16 : vector<16x128xf32>
    %21 = arith.select %18, %16, %20 : vector<16x128xi1>, vector<16x128xf32>
    %22 = arith.truncf %21 : vector<16x128xf32> to vector<16x128xbf16>
    %c0_14 = arith.constant 0 : index
    %c0_15 = arith.constant 0 : index
    %23 = vector.load %arg6[%c0_14, %c0_15] : memref<128x128xbf16, #tpu.memory_space<vmem>>, vector<128x128xbf16>
    %cst_16 = arith.constant dense<0.000000e+00> : vector<16x128xf32>
    %24 = tpu.matmul %22, %23, %cst_16 {dimension_numbers = #tpu.dot_dimension_numbers<[1], [0], [0], [1], [0, 0, 1, 1], [], []>} : vector<16x128xbf16>, vector<128x128xbf16>, vector<16x128xf32> -> vector<16x128xf32>
    %c0_17 = arith.constant 0 : index
    %c0_18 = arith.constant 0 : index
    %25 = vector.load %arg7[%c0_17, %c0_18] : memref<1x128xf32, #tpu.memory_space<vmem>>, vector<1x128xf32>
    %26 = vector.broadcast %25 : vector<1x128xf32> to vector<16x128xf32>
    %27 = arith.addf %24, %26 : vector<16x128xf32>
    %cst_19 = arith.constant 0.000000e+00 : f32
    %28 = vector.broadcast %cst_19 : f32 to vector<16x128xf32>
    %29 = arith.cmpf ogt, %27, %28 : vector<16x128xf32>
    %cst_20 = arith.constant 0.00999999977 : f32
    %30 = vector.broadcast %cst_20 : f32 to vector<16x128xf32>
    %31 = arith.mulf %30, %27 : vector<16x128xf32>
    %32 = arith.select %29, %27, %31 : vector<16x128xi1>, vector<16x128xf32>
    %33 = arith.truncf %32 : vector<16x128xf32> to vector<16x128xbf16>
    %c0_21 = arith.constant 0 : index
    %c0_22 = arith.constant 0 : index
    %34 = vector.load %arg8[%c0_21, %c0_22] : memref<128x128xbf16, #tpu.memory_space<vmem>>, vector<128x128xbf16>
    %cst_23 = arith.constant dense<0.000000e+00> : vector<16x128xf32>
    %35 = tpu.matmul %33, %34, %cst_23 {dimension_numbers = #tpu.dot_dimension_numbers<[1], [0], [0], [1], [0, 0, 1, 1], [], []>} : vector<16x128xbf16>, vector<128x128xbf16>, vector<16x128xf32> -> vector<16x128xf32>
    %c0_24 = arith.constant 0 : index
    %c0_25 = arith.constant 0 : index
    %36 = vector.load %arg9[%c0_24, %c0_25] : memref<1x128xf32, #tpu.memory_space<vmem>>, vector<1x128xf32>
    %37 = vector.broadcast %36 : vector<1x128xf32> to vector<16x128xf32>
    %38 = arith.addf %35, %37 : vector<16x128xf32>
    %cst_26 = arith.constant 0.000000e+00 : f32
    %39 = vector.broadcast %cst_26 : f32 to vector<16x128xf32>
    %40 = arith.cmpf ogt, %38, %39 : vector<16x128xf32>
    %cst_27 = arith.constant 0.00999999977 : f32
    %41 = vector.broadcast %cst_27 : f32 to vector<16x128xf32>
    %42 = arith.mulf %41, %38 : vector<16x128xf32>
    %43 = arith.select %40, %38, %42 : vector<16x128xi1>, vector<16x128xf32>
    %44 = arith.truncf %43 : vector<16x128xf32> to vector<16x128xbf16>
    %c0_28 = arith.constant 0 : index
    %c0_29 = arith.constant 0 : index
    %45 = vector.load %arg10[%c0_28, %c0_29] : memref<128x128xbf16, #tpu.memory_space<vmem>>, vector<128x128xbf16>
    %cst_30 = arith.constant dense<0.000000e+00> : vector<16x128xf32>
    %46 = tpu.matmul %44, %45, %cst_30 {dimension_numbers = #tpu.dot_dimension_numbers<[1], [0], [0], [1], [0, 0, 1, 1], [], []>} : vector<16x128xbf16>, vector<128x128xbf16>, vector<16x128xf32> -> vector<16x128xf32>
    %c0_31 = arith.constant 0 : index
    %c0_32 = arith.constant 0 : index
    %47 = vector.load %arg11[%c0_31, %c0_32] : memref<1x128xf32, #tpu.memory_space<vmem>>, vector<1x128xf32>
    %48 = vector.broadcast %47 : vector<1x128xf32> to vector<16x128xf32>
    %49 = arith.addf %46, %48 : vector<16x128xf32>
    %c0_33 = arith.constant 0 : index
    %c0_34 = arith.constant 0 : index
    %50 = vector.load %arg12[%c0_33, %c0_34] : memref<16x128xf32, #tpu.memory_space<vmem>>, vector<16x128xf32>
    tpu.vector_store %arg12[%c0_33, %c0_34], %49 {strides = array<i32>} : memref<16x128xf32, #tpu.memory_space<vmem>>, vector<16x128xf32>,
    return
  }
  func.func @transform_0(%arg0: i32) -> (i32, i32) {
    %c0_i32 = arith.constant 0 : i32
    %c0_i32_0 = arith.constant 0 : i32
    return %arg0, %c0_i32 : i32, i32
  }
  func.func @transform_1(%arg0: i32) -> (i32, i32) {
    %c0_i32 = arith.constant 0 : i32
    %c0_i32_0 = arith.constant 0 : i32
    %c0_i32_1 = arith.constant 0 : i32
    return %c0_i32, %c0_i32_0 : i32, i32
  }
  func.func @transform_2(%arg0: i32) -> (i32, i32) {
    %c0_i32 = arith.constant 0 : i32
    %c0_i32_0 = arith.constant 0 : i32
    %c0_i32_1 = arith.constant 0 : i32
    return %c0_i32, %c0_i32_0 : i32, i32
  }
  func.func @transform_3(%arg0: i32) -> (i32, i32) {
    %c0_i32 = arith.constant 0 : i32
    %c0_i32_0 = arith.constant 0 : i32
    %c0_i32_1 = arith.constant 0 : i32
    return %c0_i32, %c0_i32_0 : i32, i32
  }
  func.func @transform_4(%arg0: i32) -> (i32, i32) {
    %c0_i32 = arith.constant 0 : i32
    %c0_i32_0 = arith.constant 0 : i32
    %c0_i32_1 = arith.constant 0 : i32
    return %c0_i32, %c0_i32_0 : i32, i32
  }
  func.func @transform_5(%arg0: i32) -> (i32, i32) {
    %c0_i32 = arith.constant 0 : i32
    %c0_i32_0 = arith.constant 0 : i32
    %c0_i32_1 = arith.constant 0 : i32
    return %c0_i32, %c0_i32_0 : i32, i32
  }
  func.func @transform_6(%arg0: i32) -> (i32, i32) {
    %c0_i32 = arith.constant 0 : i32
    %c0_i32_0 = arith.constant 0 : i32
    %c0_i32_1 = arith.constant 0 : i32
    return %c0_i32, %c0_i32_0 : i32, i32
  }
  func.func @transform_7(%arg0: i32) -> (i32, i32) {
    %c0_i32 = arith.constant 0 : i32
    %c0_i32_0 = arith.constant 0 : i32
    %c0_i32_1 = arith.constant 0 : i32
    return %c0_i32, %c0_i32_0 : i32, i32
  }
  func.func @transform_8(%arg0: i32) -> (i32, i32) {
    %c0_i32 = arith.constant 0 : i32
    %c0_i32_0 = arith.constant 0 : i32
    %c0_i32_1 = arith.constant 0 : i32
    return %c0_i32, %c0_i32_0 : i32, i32
  }
  func.func @transform_9(%arg0: i32) -> (i32, i32) {
    %c0_i32 = arith.constant 0 : i32
    %c0_i32_0 = arith.constant 0 : i32
    %c0_i32_1 = arith.constant 0 : i32
    return %c0_i32, %c0_i32_0 : i32, i32
  }
  func.func @transform_10(%arg0: i32) -> (i32, i32) {
    %c0_i32 = arith.constant 0 : i32
    %c0_i32_0 = arith.constant 0 : i32
    %c0_i32_1 = arith.constant 0 : i32
    return %c0_i32, %c0_i32_0 : i32, i32
  }
  func.func @transform_11(%arg0: i32) -> (i32, i32) {
    %c0_i32 = arith.constant 0 : i32
    %c0_i32_0 = arith.constant 0 : i32
    return %arg0, %c0_i32 : i32, i32
  }
}

</mosaic_0001>

<llo_original>
// kernel: asjdanet_forward.1
$region0: #{asjdanet_forward.1}
  #allocation0 [shape = 'u32[]', space=smem, size = 0x4, offset = 0x4, fixed_abs, tag = 'smem constant byte address 0x4 - core index']
  #allocation1 [shape = 'u32[144,128]{1,0:T(1,128)}', space=vmem, size = 0x12000, scoped, tag = 'internal scratch']
  %s0 = inlined_call_operand.vmem [shape: bf16[16,384], index: 0, kind: input, shape index: {}]
  %s1 = inlined_call_operand.hbm [shape: bf16[384,256], index: 1, kind: input, shape index: {}]
  %s2 = inlined_call_operand.vmem [shape: f32[1,256], index: 2, kind: input, shape index: {}]
  %s3 = inlined_call_operand.hbm [shape: bf16[256,128], index: 3, kind: input, shape index: {}]
  %s4 = inlined_call_operand.vmem [shape: f32[1,128], index: 4, kind: input, shape index: {}]
  %s5 = inlined_call_operand.vmem [shape: bf16[128,128], index: 5, kind: input, shape index: {}]
  %s6 = inlined_call_operand.vmem [shape: f32[1,128], index: 6, kind: input, shape index: {}]
  %s7 = inlined_call_operand.hbm [shape: bf16[128,128], index: 7, kind: input, shape index: {}]
  %s8 = inlined_call_operand.vmem [shape: f32[1,128], index: 8, kind: input, shape index: {}]
  %s9 = inlined_call_operand.hbm [shape: bf16[128,128], index: 9, kind: input, shape index: {}]
  %s10 = inlined_call_operand.vmem [shape: f32[1,128], index: 10, kind: input, shape index: {}]
  %s11 = inlined_call_operand.vmem [shape: f32[16,128], index: 11, kind: output, shape index: {}]
  %s12 = sld [smem:[#allocation0]]
  $region70: #{asjdanet_forward.1} parent=0
    _
  %s14 = ssub.s32 1, %s12
  %s15 = scalar_select 0, %s14, %s12
  $region1: #{asjdanet_forward.1} parent=0
    #allocation2 [shape = 'u8[196608]{0}', space=vmem, size = 0x30000, scoped, tag = 'input window, operand 1, single buffered']
    #allocation3 [shape = 's32[1]{0}', space=sflag, size = 0x4, scoped, tag = 'scoped memory for asjdanet_forward.1']
    #allocation4 [shape = 'u8[65536]{0}', space=vmem, size = 0x10000, scoped, tag = 'input window, operand 3, single buffered']
    #allocation5 [shape = 's32[1]{0}', space=sflag, size = 0x4, scoped, tag = 'scoped memory for asjdanet_forward.1']
    #allocation6 [shape = 'u8[32768]{0}', space=vmem, size = 0x8000, scoped, tag = 'input window, operand 7, single buffered']
    #allocation7 [shape = 'u8[32768]{0}', space=vmem, size = 0x8000, scoped, tag = 'input window, operand 9, single buffered']
    #allocation8 [shape = 's32[1]{0}', space=sflag, size = 0x4, scoped, tag = 'scoped memory for asjdanet_forward.1']
    %16 = vsyncpa [#allocation3], 0
    %17 = vsyncpa [#allocation5], 0
    %18 = vsyncpa [#allocation8], 0
    // Predicated region
    $region2: #{asjdanet_forward.1} parent=1 // pred_check
      _
    $region3: #{asjdanet_forward.1} parent=1 // pred_check_branch
      %20 = sbr.rel (0) target = $region5
    $region4: #{asjdanet_forward.1} parent=1 // pred_region
      _
    $region5: #{asjdanet_forward.1} parent=1 // pred_fallthru
      _
    // Predicated region
    $region6: #{asjdanet_forward.1} parent=1 // pred_check
      _
    $region7: #{asjdanet_forward.1} parent=1 // pred_check_branch
      %22 = sbr.rel (0) target = $region9
    $region8: #{asjdanet_forward.1} parent=1 // pred_region
      %s24 = ssub.s32 6144, 6144
      %25 = vsyncadd [#allocation3], %s24
      %s26 = sshll.u32 [#allocation2], 4
      %s27 = int_to_ptr.vmem [resolvable:$true] %s26
      %32 = dma.hbm_to_vmem [thread:$0]  %s1, 6144, %s27, [#allocation3], 128, 128, 8
    $region9: #{asjdanet_forward.1} parent=1 // pred_fallthru
      _
    // Predicated region
    $region10: #{asjdanet_forward.1} parent=1 // pred_check
      _
    $region11: #{asjdanet_forward.1} parent=1 // pred_check_branch
      %34 = sbr.rel (0) target = $region13
    $region12: #{asjdanet_forward.1} parent=1 // pred_region
      _
    $region13: #{asjdanet_forward.1} parent=1 // pred_fallthru
      _
    // Predicated region
    $region14: #{asjdanet_forward.1} parent=1 // pred_check
      _
    $region15: #{asjdanet_forward.1} parent=1 // pred_check_branch
      %36 = sbr.rel (0) target = $region17
    $region16: #{asjdanet_forward.1} parent=1 // pred_region
      %s38 = ssub.s32 2048, 2048
      %39 = vsyncadd [#allocation5], %s38
      %s40 = sshll.u32 [#allocation4], 4
      %s41 = int_to_ptr.vmem [resolvable:$true] %s40
      %46 = dma.hbm_to_vmem [thread:$0]  %s3, 2048, %s41, [#allocation5], 64, 64, 4
    $region17: #{asjdanet_forward.1} parent=1 // pred_fallthru
      _
    // Predicated region
    $region18: #{asjdanet_forward.1} parent=1 // pred_check
      _
    $region19: #{asjdanet_forward.1} parent=1 // pred_check_branch
      %48 = sbr.rel (0) target = $region21
    $region20: #{asjdanet_forward.1} parent=1 // pred_region
      _
    $region21: #{asjdanet_forward.1} parent=1 // pred_fallthru
      _
    // Predicated region
    $region22: #{asjdanet_forward.1} parent=1 // pred_check
      _
    $region23: #{asjdanet_forward.1} parent=1 // pred_check_branch
      %50 = sbr.rel (0) target = $region25
    $region24: #{asjdanet_forward.1} parent=1 // pred_region
      _
    $region25: #{asjdanet_forward.1} parent=1 // pred_fallthru
      _
    // Predicated region
    $region26: #{asjdanet_forward.1} parent=1 // pred_check
      _
    $region27: #{asjdanet_forward.1} parent=1 // pred_check_branch
      %52 = sbr.rel (0) target = $region29
    $region28: #{asjdanet_forward.1} parent=1 // pred_region
      _
    $region29: #{asjdanet_forward.1} parent=1 // pred_fallthru
      _
    // Predicated region
    $region30: #{asjdanet_forward.1} parent=1 // pred_check
      _
    $region31: #{asjdanet_forward.1} parent=1 // pred_check_branch
      %54 = sbr.rel (0) target = $region33
    $region32: #{asjdanet_forward.1} parent=1 // pred_region
      %s56 = ssub.s32 1024, 1024
      %57 = vsyncadd [#allocation5], %s56
      %s58 = sshll.u32 [#allocation6], 4
      %s59 = int_to_ptr.vmem [resolvable:$true] %s58
      %64 = dma.hbm_to_vmem [thread:$0]  %s7, 1024, %s59, [#allocation5], 64, 64, 4
    $region33: #{asjdanet_forward.1} parent=1 // pred_fallthru
      _
    // Predicated region
    $region34: #{asjdanet_forward.1} parent=1 // pred_check
      _
    $region35: #{asjdanet_forward.1} parent=1 // pred_check_branch
      %66 = sbr.rel (0) target = $region37
    $region36: #{asjdanet_forward.1} parent=1 // pred_region
      _
    $region37: #{asjdanet_forward.1} parent=1 // pred_fallthru
      _
    // Predicated region
    $region38: #{asjdanet_forward.1} parent=1 // pred_check
      _
    $region39: #{asjdanet_forward.1} parent=1 // pred_check_branch
      %68 = sbr.rel (0) target = $region41
    $region40: #{asjdanet_forward.1} parent=1 // pred_region
      %s70 = ssub.s32 1024, 1024
      %71 = vsyncadd [#allocation8], %s70
      %s72 = sshll.u32 [#allocation7], 4
      %s73 = int_to_ptr.vmem [resolvable:$true] %s72
      %78 = dma.hbm_to_vmem [thread:$0]  %s9, 1024, %s73, [#allocation8], 64, 64, 4
    $region41: #{asjdanet_forward.1} parent=1 // pred_fallthru
      _
    // Predicated region
    $region42: #{asjdanet_forward.1} parent=1 // pred_check
      _
    $region43: #{asjdanet_forward.1} parent=1 // pred_check_branch
      %80 = sbr.rel (0) target = $region45
    $region44: #{asjdanet_forward.1} parent=1 // pred_region
      _
    $region45: #{asjdanet_forward.1} parent=1 // pred_fallthru
      _
    // Predicated region
    $region46: #{asjdanet_forward.1} parent=1 // pred_check
      _
    $region47: #{asjdanet_forward.1} parent=1 // pred_check_branch
      %82 = sbr.rel (0) target = $region49
    $region48: #{asjdanet_forward.1} parent=1 // pred_region
      %83 = dma.done [#allocation3], 6144
    $region49: #{asjdanet_forward.1} parent=1 // pred_fallthru
      _
    // Predicated region
    $region50: #{asjdanet_forward.1} parent=1 // pred_check
      _
    $region51: #{asjdanet_forward.1} parent=1 // pred_check_branch
      %85 = sbr.rel (0) target = $region53
    $region52: #{asjdanet_forward.1} parent=1 // pred_region
      %86 = dma.done [#allocation5], 2048
    $region53: #{asjdanet_forward.1} parent=1 // pred_fallthru
      _
    // Predicated region
    $region54: #{asjdanet_forward.1} parent=1 // pred_check
      _
    $region55: #{asjdanet_forward.1} parent=1 // pred_check_branch
      %88 = sbr.rel (0) target = $region57
    $region56: #{asjdanet_forward.1} parent=1 // pred_region
      %89 = dma.done [#allocation5], 1024
    $region57: #{asjdanet_forward.1} parent=1 // pred_fallthru
      _
    // Predicated region
    $region58: #{asjdanet_forward.1} parent=1 // pred_check
      _
    $region59: #{asjdanet_forward.1} parent=1 // pred_check_branch
      %91 = sbr.rel (0) target = $region61
    $region60: #{asjdanet_forward.1} parent=1 // pred_region
      %92 = dma.done [#allocation8], 1024
    $region61: #{asjdanet_forward.1} parent=1 // pred_fallthru
      _
    %v94 = vld [vmem:[%s0] sm:$0xff]
    %v95 = vld [vmem:[%s0 + $0x8] sm:$0xf]
    %v96 = vld [vmem:[%s0 + $0xc] sm:$0xff]
    %v97 = vld [vmem:[%s0 + $0x14] sm:$0xf]
    %v98 = vld [vmem:[#allocation2] sm:$0xff]
    %v99 = vld [vmem:[#allocation2 + $0x8] sm:$0xff]
    %v100 = vld [vmem:[#allocation2 + $0x10] sm:$0xff]
    %v101 = vld [vmem:[#allocation2 + $0x18] sm:$0xff]
    %v102 = vld [vmem:[#allocation2 + $0x20] sm:$0xff]
    %v103 = vld [vmem:[#allocation2 + $0x28] sm:$0xff]
    %v104 = vld [vmem:[#allocation2 + $0x30] sm:$0xff]
    %v105 = vld [vmem:[#allocation2 + $0x38] sm:$0xff]
    %v106 = vld [vmem:[#allocation2 + $0x40] sm:$0xff]
    %v107 = vld [vmem:[#allocation2 + $0x48] sm:$0xff]
    %v108 = vld [vmem:[#allocation2 + $0x50] sm:$0xff]
    %v109 = vld [vmem:[#allocation2 + $0x58] sm:$0xff]
    %v110 = vld [vmem:[#allocation2 + $0x60] sm:$0xff]
    %v111 = vld [vmem:[#allocation2 + $0x68] sm:$0xff]
    %v112 = vld [vmem:[#allocation2 + $0x70] sm:$0xff]
    %v113 = vld [vmem:[#allocation2 + $0x78] sm:$0xff]
    %v114 = vld [vmem:[#allocation2 + $0x80] sm:$0xff]
    %v115 = vld [vmem:[#allocation2 + $0x88] sm:$0xff]
    %v116 = vld [vmem:[#allocation2 + $0x90] sm:$0xff]
    %v117 = vld [vmem:[#allocation2 + $0x98] sm:$0xff]
    %v118 = vld [vmem:[#allocation2 + $0xa0] sm:$0xff]
    %v119 = vld [vmem:[#allocation2 + $0xa8] sm:$0xff]
    %v120 = vld [vmem:[#allocation2 + $0xb0] sm:$0xff]
    %v121 = vld [vmem:[#allocation2 + $0xb8] sm:$0xff]
    %v122 = vld [vmem:[#allocation2 + $0xc0] sm:$0xff]
    %v123 = vld [vmem:[#allocation2 + $0xc8] sm:$0xff]
    %v124 = vld [vmem:[#allocation2 + $0xd0] sm:$0xff]
    %v125 = vld [vmem:[#allocation2 + $0xd8] sm:$0xff]
    %v126 = vld [vmem:[#allocation2 + $0xe0] sm:$0xff]
    %v127 = vld [vmem:[#allocation2 + $0xe8] sm:$0xff]
    %v128 = vld [vmem:[#allocation2 + $0xf0] sm:$0xff]
    %v129 = vld [vmem:[#allocation2 + $0xf8] sm:$0xff]
    %v130 = vld [vmem:[#allocation2 + $0x100] sm:$0xff]
    %v131 = vld [vmem:[#allocation2 + $0x108] sm:$0xff]
    %v132 = vld [vmem:[#allocation2 + $0x110] sm:$0xff]
    %v133 = vld [vmem:[#allocation2 + $0x118] sm:$0xff]
    %v134 = vld [vmem:[#allocation2 + $0x120] sm:$0xff]
    %v135 = vld [vmem:[#allocation2 + $0x128] sm:$0xff]
    %v136 = vld [vmem:[#allocation2 + $0x130] sm:$0xff]
    %v137 = vld [vmem:[#allocation2 + $0x138] sm:$0xff]
    %v138 = vld [vmem:[#allocation2 + $0x140] sm:$0xff]
    %v139 = vld [vmem:[#allocation2 + $0x148] sm:$0xff]
    %v140 = vld [vmem:[#allocation2 + $0x150] sm:$0xff]
    %v141 = vld [vmem:[#allocation2 + $0x158] sm:$0xff]
    %v142 = vld [vmem:[#allocation2 + $0x160] sm:$0xff]
    %v143 = vld [vmem:[#allocation2 + $0x168] sm:$0xff]
    %v144 = vld [vmem:[#allocation2 + $0x170] sm:$0xff]
    %v145 = vld [vmem:[#allocation2 + $0x178] sm:$0xff]
    %v146 = vld [vmem:[%s2] sm:$0x3]
    %v148 = vlaneseq
    %v149 = vshrl.u32 %v148, 7
    %v150 = vsub.s32 0, %v149
    %v151 = vrot.slane %v146, %v150
    %v152 = vlaneseq
    %v153 = vshrl.u32 %v152, 7
    %v154 = vsub.s32 1, %v153
    %v155 = vrot.slane %v146, %v154
    %v162 = vunpack.c.l.b16 %v94
    %v163 = vunpack.c.h.b16 %v94
    %v164 = vunpack.c.l.b16 %v95
    %v165 = vunpack.c.l.b16 %v96
    %v166 = vunpack.c.h.b16 %v96
    %v167 = vunpack.c.l.b16 %v97
    %v168 = vpack.c.b16 %v165, %v162
    %v169 = vpack.c.b16 %v166, %v163
    %v170 = vpack.c.b16 %v167, %v164
    %v222 = vunpack.c.l.b16 %v98
    %v223 = vunpack.c.h.b16 %v98
    %v224 = vunpack.c.l.b16 %v99
    %v225 = vunpack.c.h.b16 %v99
    %v226 = vunpack.c.l.b16 %v100
    %v227 = vunpack.c.h.b16 %v100
    %v228 = vunpack.c.l.b16 %v101
    %v229 = vunpack.c.h.b16 %v101
    %v230 = vunpack.c.l.b16 %v102
    %v231 = vunpack.c.h.b16 %v102
    %v232 = vunpack.c.l.b16 %v103
    %v233 = vunpack.c.h.b16 %v103
    %v234 = vunpack.c.l.b16 %v104
    %v235 = vunpack.c.h.b16 %v104
    %v236 = vunpack.c.l.b16 %v105
    %v237 = vunpack.c.h.b16 %v105
    %v238 = vunpack.c.l.b16 %v106
    %v239 = vunpack.c.h.b16 %v106
    %v240 = vunpack.c.l.b16 %v107
    %v241 = vunpack.c.h.b16 %v107
    %v242 = vunpack.c.l.b16 %v108
    %v243 = vunpack.c.h.b16 %v108
    %v244 = vunpack.c.l.b16 %v109
    %v245 = vunpack.c.h.b16 %v109
    %v246 = vunpack.c.l.b16 %v110
    %v247 = vunpack.c.h.b16 %v110
    %v248 = vunpack.c.l.b16 %v111
    %v249 = vunpack.c.h.b16 %v111
    %v250 = vunpack.c.l.b16 %v112
    %v251 = vunpack.c.h.b16 %v112
    %v252 = vunpack.c.l.b16 %v113
    %v253 = vunpack.c.h.b16 %v113
    %v254 = vunpack.c.l.b16 %v114
    %v255 = vunpack.c.h.b16 %v114
    %v256 = vunpack.c.l.b16 %v115
    %v257 = vunpack.c.h.b16 %v115
    %v258 = vunpack.c.l.b16 %v116
    %v259 = vunpack.c.h.b16 %v116
    %v260 = vunpack.c.l.b16 %v117
    %v261 = vunpack.c.h.b16 %v117
    %v262 = vunpack.c.l.b16 %v118
    %v263 = vunpack.c.h.b16 %v118
    %v264 = vunpack.c.l.b16 %v119
    %v265 = vunpack.c.h.b16 %v119
    %v266 = vunpack.c.l.b16 %v120
    %v267 = vunpack.c.h.b16 %v120
    %v268 = vunpack.c.l.b16 %v121
    %v269 = vunpack.c.h.b16 %v121
    %v270 = vunpack.c.l.b16 %v122
    %v271 = vunpack.c.h.b16 %v122
    %v272 = vunpack.c.l.b16 %v123
    %v273 = vunpack.c.h.b16 %v123
    %v274 = vunpack.c.l.b16 %v124
    %v275 = vunpack.c.h.b16 %v124
    %v276 = vunpack.c.l.b16 %v125
    %v277 = vunpack.c.h.b16 %v125
    %v278 = vunpack.c.l.b16 %v126
    %v279 = vunpack.c.h.b16 %v126
    %v280 = vunpack.c.l.b16 %v127
    %v281 = vunpack.c.h.b16 %v127
    %v282 = vunpack.c.l.b16 %v128
    %v283 = vunpack.c.h.b16 %v128
    %v284 = vunpack.c.l.b16 %v129
    %v285 = vunpack.c.h.b16 %v129
    %v286 = vunpack.c.l.b16 %v130
    %v287 = vunpack.c.h.b16 %v130
    %v288 = vunpack.c.l.b16 %v131
    %v289 = vunpack.c.h.b16 %v131
    %v290 = vunpack.c.l.b16 %v132
    %v291 = vunpack.c.h.b16 %v132
    %v292 = vunpack.c.l.b16 %v133
    %v293 = vunpack.c.h.b16 %v133
    %v294 = vunpack.c.l.b16 %v134
    %v295 = vunpack.c.h.b16 %v134
    %v296 = vunpack.c.l.b16 %v135
    %v297 = vunpack.c.h.b16 %v135
    %v298 = vunpack.c.l.b16 %v136
    %v299 = vunpack.c.h.b16 %v136
    %v300 = vunpack.c.l.b16 %v137
    %v301 = vunpack.c.h.b16 %v137
    %v302 = vunpack.c.l.b16 %v138
    %v303 = vunpack.c.h.b16 %v138
    %v304 = vunpack.c.l.b16 %v139
    %v305 = vunpack.c.h.b16 %v139
    %v306 = vunpack.c.l.b16 %v140
    %v307 = vunpack.c.h.b16 %v140
    %v308 = vunpack.c.l.b16 %v141
    %v309 = vunpack.c.h.b16 %v141
    %v310 = vunpack.c.l.b16 %v142
    %v311 = vunpack.c.h.b16 %v142
    %v312 = vunpack.c.l.b16 %v143
    %v313 = vunpack.c.h.b16 %v143
    %v314 = vunpack.c.l.b16 %v144
    %v315 = vunpack.c.h.b16 %v144
    %v316 = vunpack.c.l.b16 %v145
    %v317 = vunpack.c.h.b16 %v145
    %v318 = vpack.c.b16 %v224, %v222
    %v319 = vpack.c.b16 %v225, %v223
    %v320 = vpack.c.b16 %v228, %v226
    %v321 = vpack.c.b16 %v229, %v227
    %v322 = vpack.c.b16 %v232, %v230
    %v323 = vpack.c.b16 %v233, %v231
    %v324 = vpack.c.b16 %v236, %v234
    %v325 = vpack.c.b16 %v237, %v235
    %v326 = vpack.c.b16 %v240, %v238
    %v327 = vpack.c.b16 %v241, %v239
    %v328 = vpack.c.b16 %v244, %v242
    %v329 = vpack.c.b16 %v245, %v243
    %v330 = vpack.c.b16 %v248, %v246
    %v331 = vpack.c.b16 %v249, %v247
    %v332 = vpack.c.b16 %v252, %v250
    %v333 = vpack.c.b16 %v253, %v251
    %v334 = vpack.c.b16 %v256, %v254
    %v335 = vpack.c.b16 %v257, %v255
    %v336 = vpack.c.b16 %v260, %v258
    %v337 = vpack.c.b16 %v261, %v259
    %v338 = vpack.c.b16 %v264, %v262
    %v339 = vpack.c.b16 %v265, %v263
    %v340 = vpack.c.b16 %v268, %v266
    %v341 = vpack.c.b16 %v269, %v267
    %v342 = vpack.c.b16 %v272, %v270
    %v343 = vpack.c.b16 %v273, %v271
    %v344 = vpack.c.b16 %v276, %v274
    %v345 = vpack.c.b16 %v277, %v275
    %v346 = vpack.c.b16 %v280, %v278
    %v347 = vpack.c.b16 %v281, %v279
    %v348 = vpack.c.b16 %v284, %v282
    %v349 = vpack.c.b16 %v285, %v283
    %v350 = vpack.c.b16 %v288, %v286
    %v351 = vpack.c.b16 %v289, %v287
    %v352 = vpack.c.b16 %v292, %v290
    %v353 = vpack.c.b16 %v293, %v291
    %v354 = vpack.c.b16 %v296, %v294
    %v355 = vpack.c.b16 %v297, %v295
    %v356 = vpack.c.b16 %v300, %v298
    %v357 = vpack.c.b16 %v301, %v299
    %v358 = vpack.c.b16 %v304, %v302
    %v359 = vpack.c.b16 %v305, %v303
    %v360 = vpack.c.b16 %v308, %v306
    %v361 = vpack.c.b16 %v309, %v307
    %v362 = vpack.c.b16 %v312, %v310
    %v363 = vpack.c.b16 %v313, %v311
    %v364 = vpack.c.b16 %v316, %v314
    %v365 = vpack.c.b16 %v317, %v315
    %414 = vmatprep.subr.bf16.mxu0 %v333
    %415 = vmatpush1.bf16.msra.mxu0 %v332
    %416 = vmatprep.subr.bf16.mxu0 %v331
    %417 = vmatpush1.bf16.msra.mxu0 %v330
    %418 = vmatprep.subr.bf16.mxu0 %v329
    %419 = vmatpush1.bf16.msra.mxu0 %v328
    %420 = vmatprep.subr.bf16.mxu0 %v327
    %421 = vmatpush1.bf16.msra.mxu0 %v326
    %422 = vmatprep.subr.bf16.mxu0 %v325
    %423 = vmatpush1.bf16.msra.mxu0 %v324
    %424 = vmatprep.subr.bf16.mxu0 %v323
    %425 = vmatpush1.bf16.msra.mxu0 %v322
    %426 = vmatprep.subr.bf16.mxu0 %v321
    %427 = vmatpush1.bf16.msra.mxu0 %v320
    %428 = vmatprep.subr.bf16.mxu0 %v319
    %429 = vmatpush1.bf16.msra.mxu0 %v318
    %430 = vmatprep.subr.bf16.mxu0 %v349
    %431 = vmatpush2.bf16.msra.mxu0 %v348
    %432 = vmatprep.subr.bf16.mxu0 %v347
    %433 = vmatpush2.bf16.msra.mxu0 %v346
    %434 = vmatprep.subr.bf16.mxu0 %v345
    %435 = vmatpush2.bf16.msra.mxu0 %v344
    %436 = vmatprep.subr.bf16.mxu0 %v343
    %437 = vmatpush2.bf16.msra.mxu0 %v342
    %438 = vmatprep.subr.bf16.mxu0 %v341
    %439 = vmatpush2.bf16.msra.mxu0 %v340
    %440 = vmatprep.subr.bf16.mxu0 %v339
    %441 = vmatpush2.bf16.msra.mxu0 %v338
    %442 = vmatprep.subr.bf16.mxu0 %v337
    %443 = vmatpush2.bf16.msra.mxu0 %v336
    %444 = vmatprep.subr.bf16.mxu0 %v335
    %445 = vmatpush2.bf16.msra.mxu0 %v334
    %446 = vmatprep.mubr.bf16.mxu0 %v169
    %447 = vmatmul.mubr.bf16.gmra.mxu0 %v168
    %v448 = vpop.f32.mrf.mxu0
    %v449 = vadd.f32 %v151, %v448
    %v450 = vpop.f32.mrf.mxu0
    %v451 = vadd.f32 %v155, %v450
    %v452 = vpop.f32.mrf.mxu0
    %v453 = vadd.f32 %v151, %v452
    %v454 = vpop.f32.mrf.mxu0
    %v455 = vadd.f32 %v155, %v454
    %456 = vdwg.mxu0
    %457 = vmatprep.subr.bf16.mxu0 %v365
    %458 = vmatpush1.bf16.msra.mxu0 %v364
    %459 = vmatprep.subr.bf16.mxu0 %v363
    %460 = vmatpush1.bf16.msra.mxu0 %v362
    %461 = vmatprep.subr.bf16.mxu0 %v361
    %462 = vmatpush1.bf16.msra.mxu0 %v360
    %463 = vmatprep.subr.bf16.mxu0 %v359
    %464 = vmatpush1.bf16.msra.mxu0 %v358
    %465 = vmatprep.subr.bf16.mxu0 %v357
    %466 = vmatpush1.bf16.msra.mxu0 %v356
    %467 = vmatprep.subr.bf16.mxu0 %v355
    %468 = vmatpush1.bf16.msra.mxu0 %v354
    %469 = vmatprep.subr.bf16.mxu0 %v353
    %470 = vmatpush1.bf16.msra.mxu0 %v352
    %471 = vmatprep.subr.bf16.mxu0 %v351
    %472 = vmatpush1.bf16.msra.mxu0 %v350
    %473 = vmatprep.subr.bf16.mxu0 0
    %474 = vmatpush2.bf16.msra.mxu0 0
    %475 = vmatprep.subr.bf16.mxu0 0
    %476 = vmatpush2.bf16.msra.mxu0 0
    %477 = vmatprep.subr.bf16.mxu0 0
    %478 = vmatpush2.bf16.msra.mxu0 0
    %479 = vmatprep.subr.bf16.mxu0 0
    %480 = vmatpush2.bf16.msra.mxu0 0
    %481 = vmatprep.subr.bf16.mxu0 0
    %482 = vmatpush2.bf16.msra.mxu0 0
    %483 = vmatprep.subr.bf16.mxu0 0
    %484 = vmatpush2.bf16.msra.mxu0 0
    %485 = vmatprep.subr.bf16.mxu0 0
    %486 = vmatpush2.bf16.msra.mxu0 0
    %487 = vmatprep.subr.bf16.mxu0 0
    %488 = vmatpush2.bf16.msra.mxu0 0
    %489 = vmatprep.mubr.bf16.mxu0 0
    %490 = vmatmul.mubr.bf16.gmra.mxu0 %v170
    %v491 = vpop.f32.mrf.mxu0
    %v492 = vadd.f32 %v449, %v491
    %v493 = vpop.f32.mrf.mxu0
    %v494 = vadd.f32 %v451, %v493
    %v495 = vpop.f32.mrf.mxu0
    %v496 = vadd.f32 %v453, %v495
    %v497 = vpop.f32.mrf.mxu0
    %v498 = vadd.f32 %v455, %v497
    %499 = vdwg.mxu0
    %vm500 = vcmp.gt.f32.partialorder %v492, 0.0
    %vm501 = vcmp.gt.f32.partialorder %v494, 0.0
    %vm502 = vcmp.gt.f32.partialorder %v496, 0.0
    %vm503 = vcmp.gt.f32.partialorder %v498, 0.0
    %v504 = vmul.f32 %v492, 0.01
    %v505 = vmul.f32 %v494, 0.01
    %v506 = vmul.f32 %v496, 0.01
    %v507 = vmul.f32 %v498, 0.01
    %v508 = vsel %vm500, %v492, %v504
    %v509 = vsel %vm501, %v494, %v505
    %v510 = vsel %vm502, %v496, %v506
    %v511 = vsel %vm503, %v498, %v507
    %v512 = vpack.c.bf16 %v510, %v508
    %v513 = vpack.c.bf16 %v511, %v509
    %v514 = vld [vmem:[#allocation4] sm:$0xf]
    %v515 = vld [vmem:[#allocation4 + $0x4] sm:$0xf]
    %v516 = vld [vmem:[#allocation4 + $0x8] sm:$0xf]
    %v517 = vld [vmem:[#allocation4 + $0xc] sm:$0xf]
    %v518 = vld [vmem:[#allocation4 + $0x10] sm:$0xf]
    %v519 = vld [vmem:[#allocation4 + $0x14] sm:$0xf]
    %v520 = vld [vmem:[#allocation4 + $0x18] sm:$0xf]
    %v521 = vld [vmem:[#allocation4 + $0x1c] sm:$0xf]
    %v522 = vld [vmem:[#allocation4 + $0x20] sm:$0xf]
    %v523 = vld [vmem:[#allocation4 + $0x24] sm:$0xf]
    %v524 = vld [vmem:[#allocation4 + $0x28] sm:$0xf]
    %v525 = vld [vmem:[#allocation4 + $0x2c] sm:$0xf]
    %v526 = vld [vmem:[#allocation4 + $0x30] sm:$0xf]
    %v527 = vld [vmem:[#allocation4 + $0x34] sm:$0xf]
    %v528 = vld [vmem:[#allocation4 + $0x38] sm:$0xf]
    %v529 = vld [vmem:[#allocation4 + $0x3c] sm:$0xf]
    %v530 = vld [vmem:[#allocation4 + $0x40] sm:$0xf]
    %v531 = vld [vmem:[#allocation4 + $0x44] sm:$0xf]
    %v532 = vld [vmem:[#allocation4 + $0x48] sm:$0xf]
    %v533 = vld [vmem:[#allocation4 + $0x4c] sm:$0xf]
    %v534 = vld [vmem:[#allocation4 + $0x50] sm:$0xf]
    %v535 = vld [vmem:[#allocation4 + $0x54] sm:$0xf]
    %v536 = vld [vmem:[#allocation4 + $0x58] sm:$0xf]
    %v537 = vld [vmem:[#allocation4 + $0x5c] sm:$0xf]
    %v538 = vld [vmem:[#allocation4 + $0x60] sm:$0xf]
    %v539 = vld [vmem:[#allocation4 + $0x64] sm:$0xf]
    %v540 = vld [vmem:[#allocation4 + $0x68] sm:$0xf]
    %v541 = vld [vmem:[#allocation4 + $0x6c] sm:$0xf]
    %v542 = vld [vmem:[#allocation4 + $0x70] sm:$0xf]
    %v543 = vld [vmem:[#allocation4 + $0x74] sm:$0xf]
    %v544 = vld [vmem:[#allocation4 + $0x78] sm:$0xf]
    %v545 = vld [vmem:[#allocation4 + $0x7c] sm:$0xf]
    %v546 = vld [vmem:[%s4] sm:$0x1]
    %v548 = vlaneseq
    %v549 = vshrl.u32 %v548, 7
    %v550 = vsub.s32 0, %v549
    %v551 = vrot.slane %v546, %v550
    %v585 = vunpack.c.l.b16 %v514
    %v586 = vunpack.c.l.b16 %v515
    %v587 = vunpack.c.l.b16 %v516
    %v588 = vunpack.c.l.b16 %v517
    %v589 = vunpack.c.l.b16 %v518
    %v590 = vunpack.c.l.b16 %v519
    %v591 = vunpack.c.l.b16 %v520
    %v592 = vunpack.c.l.b16 %v521
    %v593 = vunpack.c.l.b16 %v522
    %v594 = vunpack.c.l.b16 %v523
    %v595 = vunpack.c.l.b16 %v524
    %v596 = vunpack.c.l.b16 %v525
    %v597 = vunpack.c.l.b16 %v526
    %v598 = vunpack.c.l.b16 %v527
    %v599 = vunpack.c.l.b16 %v528
    %v600 = vunpack.c.l.b16 %v529
    %v601 = vunpack.c.l.b16 %v530
    %v602 = vunpack.c.l.b16 %v531
    %v603 = vunpack.c.l.b16 %v532
    %v604 = vunpack.c.l.b16 %v533
    %v605 = vunpack.c.l.b16 %v534
    %v606 = vunpack.c.l.b16 %v535
    %v607 = vunpack.c.l.b16 %v536
    %v608 = vunpack.c.l.b16 %v537
    %v609 = vunpack.c.l.b16 %v538
    %v610 = vunpack.c.l.b16 %v539
    %v611 = vunpack.c.l.b16 %v540
    %v612 = vunpack.c.l.b16 %v541
    %v613 = vunpack.c.l.b16 %v542
    %v614 = vunpack.c.l.b16 %v543
    %v615 = vunpack.c.l.b16 %v544
    %v616 = vunpack.c.l.b16 %v545
    %v617 = vpack.c.b16 %v586, %v585
    %v618 = vpack.c.b16 %v588, %v587
    %v619 = vpack.c.b16 %v590, %v589
    %v620 = vpack.c.b16 %v592, %v591
    %v621 = vpack.c.b16 %v594, %v593
    %v622 = vpack.c.b16 %v596, %v595
    %v623 = vpack.c.b16 %v598, %v597
    %v624 = vpack.c.b16 %v600, %v599
    %v625 = vpack.c.b16 %v602, %v601
    %v626 = vpack.c.b16 %v604, %v603
    %v627 = vpack.c.b16 %v606, %v605
    %v628 = vpack.c.b16 %v608, %v607
    %v629 = vpack.c.b16 %v610, %v609
    %v630 = vpack.c.b16 %v612, %v611
    %v631 = vpack.c.b16 %v614, %v613
    %v632 = vpack.c.b16 %v616, %v615
    %649 = vmatprep.subr.bf16.mxu0 0
    %650 = vmatpush1.bf16.msra.mxu0 %v624
    %651 = vmatprep.subr.bf16.mxu0 0
    %652 = vmatpush1.bf16.msra.mxu0 %v623
    %653 = vmatprep.subr.bf16.mxu0 0
    %654 = vmatpush1.bf16.msra.mxu0 %v622
    %655 = vmatprep.subr.bf16.mxu0 0
    %656 = vmatpush1.bf16.msra.mxu0 %v621
    %657 = vmatprep.subr.bf16.mxu0 0
    %658 = vmatpush1.bf16.msra.mxu0 %v620
    %659 = vmatprep.subr.bf16.mxu0 0
    %660 = vmatpush1.bf16.msra.mxu0 %v619
    %661 = vmatprep.subr.bf16.mxu0 0
    %662 = vmatpush1.bf16.msra.mxu0 %v618
    %663 = vmatprep.subr.bf16.mxu0 0
    %664 = vmatpush1.bf16.msra.mxu0 %v617
    %665 = vmatprep.subr.bf16.mxu0 0
    %666 = vmatpush2.bf16.msra.mxu0 %v632
    %667 = vmatprep.subr.bf16.mxu0 0
    %668 = vmatpush2.bf16.msra.mxu0 %v631
    %669 = vmatprep.subr.bf16.mxu0 0
    %670 = vmatpush2.bf16.msra.mxu0 %v630
    %671 = vmatprep.subr.bf16.mxu0 0
    %672 = vmatpush2.bf16.msra.mxu0 %v629
    %673 = vmatprep.subr.bf16.mxu0 0
    %674 = vmatpush2.bf16.msra.mxu0 %v628
    %675 = vmatprep.subr.bf16.mxu0 0
    %676 = vmatpush2.bf16.msra.mxu0 %v627
    %677 = vmatprep.subr.bf16.mxu0 0
    %678 = vmatpush2.bf16.msra.mxu0 %v626
    %679 = vmatprep.subr.bf16.mxu0 0
    %680 = vmatpush2.bf16.msra.mxu0 %v625
    %681 = vmatprep.mubr.bf16.mxu0 %v513
    %682 = vmatmul.mubr.bf16.gmra.mxu0 %v512
    %v683 = vpop.f32.mrf.mxu0
    %v684 = vadd.f32 %v551, %v683
    %v685 = vpop.f32.mrf.mxu0
    %v686 = vpop.f32.mrf.mxu0
    %v687 = vadd.f32 %v551, %v686
    %v688 = vpop.f32.mrf.mxu0
    %689 = vdwg.mxu0
    %vm690 = vcmp.gt.f32.partialorder %v684, 0.0
    %vm691 = vcmp.gt.f32.partialorder %v687, 0.0
    %v692 = vmul.f32 %v684, 0.01
    %v693 = vmul.f32 %v687, 0.01
    %v694 = vsel %vm690, %v684, %v692
    %v695 = vsel %vm691, %v687, %v693
    %v696 = vpack.c.bf16 %v695, %v694
    %v697 = vld [vmem:[%s5] sm:$0xf]
    %v698 = vld [vmem:[%s5 + $0x4] sm:$0xf]
    %v699 = vld [vmem:[%s5 + $0x8] sm:$0xf]
    %v700 = vld [vmem:[%s5 + $0xc] sm:$0xf]
    %v701 = vld [vmem:[%s5 + $0x10] sm:$0xf]
    %v702 = vld [vmem:[%s5 + $0x14] sm:$0xf]
    %v703 = vld [vmem:[%s5 + $0x18] sm:$0xf]
    %v704 = vld [vmem:[%s5 + $0x1c] sm:$0xf]
    %v705 = vld [vmem:[%s5 + $0x20] sm:$0xf]
    %v706 = vld [vmem:[%s5 + $0x24] sm:$0xf]
    %v707 = vld [vmem:[%s5 + $0x28] sm:$0xf]
    %v708 = vld [vmem:[%s5 + $0x2c] sm:$0xf]
    %v709 = vld [vmem:[%s5 + $0x30] sm:$0xf]
    %v710 = vld [vmem:[%s5 + $0x34] sm:$0xf]
    %v711 = vld [vmem:[%s5 + $0x38] sm:$0xf]
    %v712 = vld [vmem:[%s5 + $0x3c] sm:$0xf]
    %v713 = vld [vmem:[%s6] sm:$0x1]
    %v715 = vlaneseq
    %v716 = vshrl.u32 %v715, 7
    %v717 = vsub.s32 0, %v716
    %v718 = vrot.slane %v713, %v717
    %v736 = vunpack.c.l.b16 %v697
    %v737 = vunpack.c.l.b16 %v698
    %v738 = vunpack.c.l.b16 %v699
    %v739 = vunpack.c.l.b16 %v700
    %v740 = vunpack.c.l.b16 %v701
    %v741 = vunpack.c.l.b16 %v702
    %v742 = vunpack.c.l.b16 %v703
    %v743 = vunpack.c.l.b16 %v704
    %v744 = vunpack.c.l.b16 %v705
    %v745 = vunpack.c.l.b16 %v706
    %v746 = vunpack.c.l.b16 %v707
    %v747 = vunpack.c.l.b16 %v708
    %v748 = vunpack.c.l.b16 %v709
    %v749 = vunpack.c.l.b16 %v710
    %v750 = vunpack.c.l.b16 %v711
    %v751 = vunpack.c.l.b16 %v712
    %v752 = vpack.c.b16 %v737, %v736
    %v753 = vpack.c.b16 %v739, %v738
    %v754 = vpack.c.b16 %v741, %v740
    %v755 = vpack.c.b16 %v743, %v742
    %v756 = vpack.c.b16 %v745, %v744
    %v757 = vpack.c.b16 %v747, %v746
    %v758 = vpack.c.b16 %v749, %v748
    %v759 = vpack.c.b16 %v751, %v750
    %768 = vmatprep.subr.bf16.mxu0 0
    %769 = vmatpush1.bf16.msra.mxu0 %v759
    %770 = vmatprep.subr.bf16.mxu0 0
    %771 = vmatpush1.bf16.msra.mxu0 %v758
    %772 = vmatprep.subr.bf16.mxu0 0
    %773 = vmatpush1.bf16.msra.mxu0 %v757
    %774 = vmatprep.subr.bf16.mxu0 0
    %775 = vmatpush1.bf16.msra.mxu0 %v756
    %776 = vmatprep.subr.bf16.mxu0 0
    %777 = vmatpush1.bf16.msra.mxu0 %v755
    %778 = vmatprep.subr.bf16.mxu0 0
    %779 = vmatpush1.bf16.msra.mxu0 %v754
    %780 = vmatprep.subr.bf16.mxu0 0
    %781 = vmatpush1.bf16.msra.mxu0 %v753
    %782 = vmatprep.subr.bf16.mxu0 0
    %783 = vmatpush1.bf16.msra.mxu0 %v752
    %784 = vmatprep.subr.bf16.mxu0 0
    %785 = vmatpush2.bf16.msra.mxu0 0
    %786 = vmatprep.subr.bf16.mxu0 0
    %787 = vmatpush2.bf16.msra.mxu0 0
    %788 = vmatprep.subr.bf16.mxu0 0
    %789 = vmatpush2.bf16.msra.mxu0 0
    %790 = vmatprep.subr.bf16.mxu0 0
    %791 = vmatpush2.bf16.msra.mxu0 0
    %792 = vmatprep.subr.bf16.mxu0 0
    %793 = vmatpush2.bf16.msra.mxu0 0
    %794 = vmatprep.subr.bf16.mxu0 0
    %795 = vmatpush2.bf16.msra.mxu0 0
    %796 = vmatprep.subr.bf16.mxu0 0
    %797 = vmatpush2.bf16.msra.mxu0 0
    %798 = vmatprep.subr.bf16.mxu0 0
    %799 = vmatpush2.bf16.msra.mxu0 0
    %800 = vmatprep.mubr.bf16.mxu0 0
    %801 = vmatmul.mubr.bf16.gmra.mxu0 %v696
    %v802 = vpop.f32.mrf.mxu0
    %v803 = vadd.f32 %v718, %v802
    %v804 = vpop.f32.mrf.mxu0
    %v805 = vpop.f32.mrf.mxu0
    %v806 = vadd.f32 %v718, %v805
    %v807 = vpop.f32.mrf.mxu0
    %808 = vdwg.mxu0
    %vm809 = vcmp.gt.f32.partialorder %v803, 0.0
    %vm810 = vcmp.gt.f32.partialorder %v806, 0.0
    %v811 = vmul.f32 %v803, 0.01
    %v812 = vmul.f32 %v806, 0.01
    %v813 = vsel %vm809, %v803, %v811
    %v814 = vsel %vm810, %v806, %v812
    %v815 = vpack.c.bf16 %v814, %v813
    %v816 = vld [vmem:[#allocation6] sm:$0xf]
    %v817 = vld [vmem:[#allocation6 + $0x4] sm:$0xf]
    %v818 = vld [vmem:[#allocation6 + $0x8] sm:$0xf]
    %v819 = vld [vmem:[#allocation6 + $0xc] sm:$0xf]
    %v820 = vld [vmem:[#allocation6 + $0x10] sm:$0xf]
    %v821 = vld [vmem:[#allocation6 + $0x14] sm:$0xf]
    %v822 = vld [vmem:[#allocation6 + $0x18] sm:$0xf]
    %v823 = vld [vmem:[#allocation6 + $0x1c] sm:$0xf]
    %v824 = vld [vmem:[#allocation6 + $0x20] sm:$0xf]
    %v825 = vld [vmem:[#allocation6 + $0x24] sm:$0xf]
    %v826 = vld [vmem:[#allocation6 + $0x28] sm:$0xf]
    %v827 = vld [vmem:[#allocation6 + $0x2c] sm:$0xf]
    %v828 = vld [vmem:[#allocation6 + $0x30] sm:$0xf]
    %v829 = vld [vmem:[#allocation6 + $0x34] sm:$0xf]
    %v830 = vld [vmem:[#allocation6 + $0x38] sm:$0xf]
    %v831 = vld [vmem:[#allocation6 + $0x3c] sm:$0xf]
    %v832 = vld [vmem:[%s8] sm:$0x1]
    %v834 = vlaneseq
    %v835 = vshrl.u32 %v834, 7
    %v836 = vsub.s32 0, %v835
    %v837 = vrot.slane %v832, %v836
    %v855 = vunpack.c.l.b16 %v816
    %v856 = vunpack.c.l.b16 %v817
    %v857 = vunpack.c.l.b16 %v818
    %v858 = vunpack.c.l.b16 %v819
    %v859 = vunpack.c.l.b16 %v820
    %v860 = vunpack.c.l.b16 %v821
    %v861 = vunpack.c.l.b16 %v822
    %v862 = vunpack.c.l.b16 %v823
    %v863 = vunpack.c.l.b16 %v824
    %v864 = vunpack.c.l.b16 %v825
    %v865 = vunpack.c.l.b16 %v826
    %v866 = vunpack.c.l.b16 %v827
    %v867 = vunpack.c.l.b16 %v828
    %v868 = vunpack.c.l.b16 %v829
    %v869 = vunpack.c.l.b16 %v830
    %v870 = vunpack.c.l.b16 %v831
    %v871 = vpack.c.b16 %v856, %v855
    %v872 = vpack.c.b16 %v858, %v857
    %v873 = vpack.c.b16 %v860, %v859
    %v874 = vpack.c.b16 %v862, %v861
    %v875 = vpack.c.b16 %v864, %v863
    %v876 = vpack.c.b16 %v866, %v865
    %v877 = vpack.c.b16 %v868, %v867
    %v878 = vpack.c.b16 %v870, %v869
    %887 = vmatprep.subr.bf16.mxu0 0
    %888 = vmatpush1.bf16.msra.mxu0 %v878
    %889 = vmatprep.subr.bf16.mxu0 0
    %890 = vmatpush1.bf16.msra.mxu0 %v877
    %891 = vmatprep.subr.bf16.mxu0 0
    %892 = vmatpush1.bf16.msra.mxu0 %v876
    %893 = vmatprep.subr.bf16.mxu0 0
    %894 = vmatpush1.bf16.msra.mxu0 %v875
    %895 = vmatprep.subr.bf16.mxu0 0
    %896 = vmatpush1.bf16.msra.mxu0 %v874
    %897 = vmatprep.subr.bf16.mxu0 0
    %898 = vmatpush1.bf16.msra.mxu0 %v873
    %899 = vmatprep.subr.bf16.mxu0 0
    %900 = vmatpush1.bf16.msra.mxu0 %v872
    %901 = vmatprep.subr.bf16.mxu0 0
    %902 = vmatpush1.bf16.msra.mxu0 %v871
    %903 = vmatprep.subr.bf16.mxu0 0
    %904 = vmatpush2.bf16.msra.mxu0 0
    %905 = vmatprep.subr.bf16.mxu0 0
    %906 = vmatpush2.bf16.msra.mxu0 0
    %907 = vmatprep.subr.bf16.mxu0 0
    %908 = vmatpush2.bf16.msra.mxu0 0
    %909 = vmatprep.subr.bf16.mxu0 0
    %910 = vmatpush2.bf16.msra.mxu0 0
    %911 = vmatprep.subr.bf16.mxu0 0
    %912 = vmatpush2.bf16.msra.mxu0 0
    %913 = vmatprep.subr.bf16.mxu0 0
    %914 = vmatpush2.bf16.msra.mxu0 0
    %915 = vmatprep.subr.bf16.mxu0 0
    %916 = vmatpush2.bf16.msra.mxu0 0
    %917 = vmatprep.subr.bf16.mxu0 0
    %918 = vmatpush2.bf16.msra.mxu0 0
    %919 = vmatprep.mubr.bf16.mxu0 0
    %920 = vmatmul.mubr.bf16.gmra.mxu0 %v815
    %v921 = vpop.f32.mrf.mxu0
    %v922 = vadd.f32 %v837, %v921
    %v923 = vpop.f32.mrf.mxu0
    %v924 = vpop.f32.mrf.mxu0
    %v925 = vadd.f32 %v837, %v924
    %v926 = vpop.f32.mrf.mxu0
    %927 = vdwg.mxu0
    %vm928 = vcmp.gt.f32.partialorder %v922, 0.0
    %vm929 = vcmp.gt.f32.partialorder %v925, 0.0
    %v930 = vmul.f32 %v922, 0.01
    %v931 = vmul.f32 %v925, 0.01
    %v932 = vsel %vm928, %v922, %v930
    %v933 = vsel %vm929, %v925, %v931
    %v934 = vpack.c.bf16 %v933, %v932
    %v935 = vld [vmem:[#allocation7] sm:$0xf]
    %v936 = vld [vmem:[#allocation7 + $0x4] sm:$0xf]
    %v937 = vld [vmem:[#allocation7 + $0x8] sm:$0xf]
    %v938 = vld [vmem:[#allocation7 + $0xc] sm:$0xf]
    %v939 = vld [vmem:[#allocation7 + $0x10] sm:$0xf]
    %v940 = vld [vmem:[#allocation7 + $0x14] sm:$0xf]
    %v941 = vld [vmem:[#allocation7 + $0x18] sm:$0xf]
    %v942 = vld [vmem:[#allocation7 + $0x1c] sm:$0xf]
    %v943 = vld [vmem:[#allocation7 + $0x20] sm:$0xf]
    %v944 = vld [vmem:[#allocation7 + $0x24] sm:$0xf]
    %v945 = vld [vmem:[#allocation7 + $0x28] sm:$0xf]
    %v946 = vld [vmem:[#allocation7 + $0x2c] sm:$0xf]
    %v947 = vld [vmem:[#allocation7 + $0x30] sm:$0xf]
    %v948 = vld [vmem:[#allocation7 + $0x34] sm:$0xf]
    %v949 = vld [vmem:[#allocation7 + $0x38] sm:$0xf]
    %v950 = vld [vmem:[#allocation7 + $0x3c] sm:$0xf]
    %v951 = vld [vmem:[%s10] sm:$0x1]
    %v953 = vlaneseq
    %v954 = vshrl.u32 %v953, 7
    %v955 = vsub.s32 0, %v954
    %v956 = vrot.slane %v951, %v955
    %v974 = vunpack.c.l.b16 %v935
    %v975 = vunpack.c.l.b16 %v936
    %v976 = vunpack.c.l.b16 %v937
    %v977 = vunpack.c.l.b16 %v938
    %v978 = vunpack.c.l.b16 %v939
    %v979 = vunpack.c.l.b16 %v940
    %v980 = vunpack.c.l.b16 %v941
    %v981 = vunpack.c.l.b16 %v942
    %v982 = vunpack.c.l.b16 %v943
    %v983 = vunpack.c.l.b16 %v944
    %v984 = vunpack.c.l.b16 %v945
    %v985 = vunpack.c.l.b16 %v946
    %v986 = vunpack.c.l.b16 %v947
    %v987 = vunpack.c.l.b16 %v948
    %v988 = vunpack.c.l.b16 %v949
    %v989 = vunpack.c.l.b16 %v950
    %v990 = vpack.c.b16 %v975, %v974
    %v991 = vpack.c.b16 %v977, %v976
    %v992 = vpack.c.b16 %v979, %v978
    %v993 = vpack.c.b16 %v981, %v980
    %v994 = vpack.c.b16 %v983, %v982
    %v995 = vpack.c.b16 %v985, %v984
    %v996 = vpack.c.b16 %v987, %v986
    %v997 = vpack.c.b16 %v989, %v988
    %1006 = vmatprep.subr.bf16.mxu0 0
    %1007 = vmatpush1.bf16.msra.mxu0 %v997
    %1008 = vmatprep.subr.bf16.mxu0 0
    %1009 = vmatpush1.bf16.msra.mxu0 %v996
    %1010 = vmatprep.subr.bf16.mxu0 0
    %1011 = vmatpush1.bf16.msra.mxu0 %v995
    %1012 = vmatprep.subr.bf16.mxu0 0
    %1013 = vmatpush1.bf16.msra.mxu0 %v994
    %1014 = vmatprep.subr.bf16.mxu0 0
    %1015 = vmatpush1.bf16.msra.mxu0 %v993
    %1016 = vmatprep.subr.bf16.mxu0 0
    %1017 = vmatpush1.bf16.msra.mxu0 %v992
    %1018 = vmatprep.subr.bf16.mxu0 0
    %1019 = vmatpush1.bf16.msra.mxu0 %v991
    %1020 = vmatprep.subr.bf16.mxu0 0
    %1021 = vmatpush1.bf16.msra.mxu0 %v990
    %1022 = vmatprep.subr.bf16.mxu0 0
    %1023 = vmatpush2.bf16.msra.mxu0 0
    %1024 = vmatprep.subr.bf16.mxu0 0
    %1025 = vmatpush2.bf16.msra.mxu0 0
    %1026 = vmatprep.subr.bf16.mxu0 0
    %1027 = vmatpush2.bf16.msra.mxu0 0
    %1028 = vmatprep.subr.bf16.mxu0 0
    %1029 = vmatpush2.bf16.msra.mxu0 0
    %1030 = vmatprep.subr.bf16.mxu0 0
    %1031 = vmatpush2.bf16.msra.mxu0 0
    %1032 = vmatprep.subr.bf16.mxu0 0
    %1033 = vmatpush2.bf16.msra.mxu0 0
    %1034 = vmatprep.subr.bf16.mxu0 0
    %1035 = vmatpush2.bf16.msra.mxu0 0
    %1036 = vmatprep.subr.bf16.mxu0 0
    %1037 = vmatpush2.bf16.msra.mxu0 0
    %1038 = vmatprep.mubr.bf16.mxu0 0
    %1039 = vmatmul.mubr.bf16.gmra.mxu0 %v934
    %v1040 = vpop.f32.mrf.mxu0
    %v1041 = vadd.f32 %v956, %v1040
    %v1042 = vpop.f32.mrf.mxu0
    %v1043 = vpop.f32.mrf.mxu0
    %v1044 = vadd.f32 %v956, %v1043
    %v1045 = vpop.f32.mrf.mxu0
    %1046 = vdwg.mxu0
    %1047 = vst [vmem:[%s11] sm:$0xff] %v1041
    %1048 = vst [vmem:[%s11 + $0x8] sm:$0xff] %v1044
    // Predicated region
    $region62: #{asjdanet_forward.1} parent=1 // pred_check
      _
    $region63: #{asjdanet_forward.1} parent=1 // pred_check_branch
      %1050 = sbr.rel (0) target = $region65
    $region64: #{asjdanet_forward.1} parent=1 // pred_region
      _
    $region65: #{asjdanet_forward.1} parent=1 // pred_fallthru
      _
    // Predicated region
    $region66: #{asjdanet_forward.1} parent=1 // pred_check
      _
    $region67: #{asjdanet_forward.1} parent=1 // pred_check_branch
      %1052 = sbr.rel (0) target = $region69
    $region68: #{asjdanet_forward.1} parent=1 // pred_region
      _
    $region69: #{asjdanet_forward.1} parent=1 // pred_fallthru
      _
    %1053 = vsyncpa [#allocation3], 1
    %1054 = vsyncpa [#allocation5], 1
    %1055 = vsyncpa [#allocation8], 1

</llo_original>
